<compile_context>
chip_gen: v7x
topology: tpu7x:2x2x1
jax: 0.10.0
libtpu: 0.0.40
codegen_flags: <defaults>
</compile_context>

<pallas_src>
import functools

import jax
import jax.numpy as jnp
from jax import lax
from jax.experimental import pallas as pl
from jax.experimental.pallas import tpu as pltpu


def _round_up(x, m):
    return (x + m - 1) // m * m


def _pad_last(a, target):
    pad = target - a.shape[-1]
    if pad == 0:
        return a
    widths = [(0, 0)] * (a.ndim - 1) + [(0, pad)]
    return jnp.pad(a, widths)


# ---------------------------------------------------------------------------
# Kernel 1: fused BN(affine) + ReLU + 1x1 conv (row-tiled channel matmul)
#           + per-tile BN statistics (sum, sum^2) for the *next* stage.
# ---------------------------------------------------------------------------
def _bn_relu_conv1x1_kernel(x_ref, scale_ref, bias_ref, w_ref, b_ref,
                            o_ref, stats_ref, *, m_true, tm, mm_dtype):
    # BN affine + ReLU in f32 (VPU); cast only the MXU operand.
    x = x_ref[...].astype(jnp.float32)
    a = jnp.maximum(x * scale_ref[...] + bias_ref[...], 0.0)
    y = jnp.dot(a.astype(mm_dtype), w_ref[...],
                preferred_element_type=jnp.float32) + b_ref[...]
    o_ref[...] = y.astype(o_ref.dtype)

    coutp = y.shape[-1]
    if m_true % tm == 0:
        ym = y
    else:
        # Mask the zero-padded tail rows out of the statistics.
        row = pl.program_id(0) * tm + lax.broadcasted_iota(jnp.int32, (tm, 1), 0)
        ym = jnp.where(row < m_true, y, 0.0)

    s = jnp.sum(ym, axis=0, keepdims=True)          # (1, coutp)
    q = jnp.sum(ym * ym, axis=0, keepdims=True)     # (1, coutp)
    ridx = lax.broadcasted_iota(jnp.int32, (8, coutp), 0)
    blk = jnp.where(ridx == 0, jnp.broadcast_to(s, (8, coutp)),
                    jnp.where(ridx == 1, jnp.broadcast_to(q, (8, coutp)), 0.0))
    stats_ref[...] = blk[None]


def bn_relu_conv1x1(x2d, scale, bias, w, b, *, mm_dtype=jnp.bfloat16,
                    out_dtype=jnp.float32, tm=512):
    """x2d: (M, Cin) flattened N*H*W pixels.  w: (Cin, Cout_padded).
    Returns (y (M, Cout_padded) out_dtype, stats (grid, 8, Cout_padded) f32)."""
    M, cin = x2d.shape
    coutp = w.shape[1]
    # 512-row tiles; pad M up instead of a tm=M fallback.
    tm = min(tm, _round_up(M, 8))
    m_pad = _round_up(M, tm)
    if m_pad != M:
        x2d = jnp.pad(x2d, ((0, m_pad - M), (0, 0)))
    grid = m_pad // tm

    kern = functools.partial(_bn_relu_conv1x1_kernel, m_true=M, tm=tm,
                             mm_dtype=mm_dtype)
    y, stats = pl.pallas_call(
        kern,
        out_shape=(jax.ShapeDtypeStruct((m_pad, coutp), out_dtype),
                   jax.ShapeDtypeStruct((grid, 8, coutp), jnp.float32)),
        grid_spec=pltpu.PrefetchScalarGridSpec(
            num_scalar_prefetch=0,
            grid=(grid,),
            in_specs=[
                pl.BlockSpec((tm, cin), lambda i: (i, 0)),
                pl.BlockSpec((1, cin), lambda i: (0, 0)),
                pl.BlockSpec((1, cin), lambda i: (0, 0)),
                pl.BlockSpec((cin, coutp), lambda i: (0, 0)),
                pl.BlockSpec((1, coutp), lambda i: (0, 0)),
            ],
            out_specs=[
                pl.BlockSpec((tm, coutp), lambda i: (i, 0)),
                pl.BlockSpec((1, 8, coutp), lambda i: (i, 0, 0)),
            ],
        ),
        compiler_params=pltpu.CompilerParams(
            dimension_semantics=("parallel",),
            vmem_limit_bytes=64 * 1024 * 1024,
        ),
    )(x2d,
      scale.reshape(1, cin).astype(jnp.float32),
      bias.reshape(1, cin).astype(jnp.float32),
      w.astype(mm_dtype),
      b.reshape(1, coutp).astype(jnp.float32))
    if m_pad != M:
        y = y[:M]
    return y, stats


# ---------------------------------------------------------------------------
# Kernel 2: fused BN(affine) + ReLU + zero-pad + 3x3 conv (stride, padding)
#           + per-image BN statistics for the next stage.
#   One image per grid step; 3x3 conv = 9 shifted channel matmuls accumulated
#   into a VMEM scratch accumulator (bias folded into the first tap).
# ---------------------------------------------------------------------------
def _bn_relu_conv3x3_kernel(x_ref, scale_ref, bias_ref, w_ref, b_ref,
                            o_ref, stats_ref, pad_ref, acc_ref,
                            *, stride, padding, Ho, Wo, mm_dtype):
    H, W, C = x_ref.shape[1], x_ref.shape[2], x_ref.shape[3]
    coutp = w_ref.shape[-1]
    Hp, Wp = H + 2 * padding, W + 2 * padding

    # BN affine + ReLU in f32; cast into the padded-activation scratch (MXU dtype).
    a = jnp.maximum(x_ref[0].astype(jnp.float32) * scale_ref[...] + bias_ref[...], 0.0)

    # Zero only the halo border each step (interior fully overwritten below).
    # Per-step border zeroing stays correct when the batch axis is sharded
    # across TensorCores ("parallel").
    if padding > 0:
        zrow = jnp.zeros((padding, Wp, C), pad_ref.dtype)
        zcol = jnp.zeros((Hp, padding, C), pad_ref.dtype)
        pad_ref[0:padding, :, :] = zrow
        pad_ref[Hp - padding:Hp, :, :] = zrow
        pad_ref[:, 0:padding, :] = zcol
        pad_ref[:, Wp - padding:Wp, :] = zcol
    pad_ref[padding:padding + H, padding:padding + W, :] = a.astype(pad_ref.dtype)

    # 9 shifted channel matmuls accumulated into VMEM scratch (flat vreg pressure).
    first = True
    for kh in range(3):
        for kw in range(3):
            if stride == 1:
                patch = pad_ref[kh:kh + Ho, kw:kw + Wo, :]
            else:
                # TODO(synk): for stride>1, replace the 9 sublane-strided gathers
                # with a one-time even/odd plane decomposition of pad_ref.
                patch = pad_ref[pl.ds(kh, Ho, stride=stride),
                                pl.ds(kw, Wo, stride=stride), :]
            tap = jnp.dot(patch.reshape(Ho * Wo, C), w_ref[kh, kw],
                          preferred_element_type=jnp.float32)
            if first:
                acc_ref[...] = tap + b_ref[...]     # bias folded into first tap
                first = False
            else:
                acc_ref[...] += tap

    y = acc_ref[...]                                # (Ho*Wo, coutp) f32
    o_ref[...] = y.reshape(1, Ho, Wo, coutp).astype(o_ref.dtype)

    # Per-image partial BN stats (f32, pre-cast) for the next stage.
    s = jnp.sum(y, axis=0, keepdims=True)
    q = jnp.sum(y * y, axis=0, keepdims=True)
    ridx = lax.broadcasted_iota(jnp.int32, (8, coutp), 0)
    blk = jnp.where(ridx == 0, jnp.broadcast_to(s, (8, coutp)),
                    jnp.where(ridx == 1, jnp.broadcast_to(q, (8, coutp)), 0.0))
    stats_ref[...] = blk[None]


def bn_relu_conv3x3(x, scale, bias, w, b, stride, padding, *,
                    mm_dtype=jnp.bfloat16, out_dtype=jnp.float32):
    """x: (N, H, W, C) NHWC.  w: (3, 3, C, Cout_padded).
    Returns (y (N, Ho, Wo, Cout_padded) out_dtype, stats (N, 8, Cout_padded) f32)."""
    N, H, W, C = x.shape
    coutp = w.shape[-1]
    Ho = (H + 2 * padding - 3) // stride + 1
    Wo = (W + 2 * padding - 3) // stride + 1
    Hp, Wp = H + 2 * padding, W + 2 * padding

    # TODO(synk): for large images on v7x (64 MiB VMEM), tile H into row strips
    # with a 2-row halo instead of one whole image per grid step.
    kern = functools.partial(_bn_relu_conv3x3_kernel, stride=stride,
                             padding=padding, Ho=Ho, Wo=Wo, mm_dtype=mm_dtype)
    y, stats = pl.pallas_call(
        kern,
        out_shape=(jax.ShapeDtypeStruct((N, Ho, Wo, coutp), out_dtype),
                   jax.ShapeDtypeStruct((N, 8, coutp), jnp.float32)),
        grid_spec=pltpu.PrefetchScalarGridSpec(
            num_scalar_prefetch=0,
            grid=(N,),
            in_specs=[
                pl.BlockSpec((1, H, W, C), lambda n: (n, 0, 0, 0)),
                pl.BlockSpec((1, 1, C), lambda n: (0, 0, 0)),
                pl.BlockSpec((1, 1, C), lambda n: (0, 0, 0)),
                pl.BlockSpec((3, 3, C, coutp), lambda n: (0, 0, 0, 0)),
                pl.BlockSpec((1, coutp), lambda n: (0, 0)),
            ],
            out_specs=[
                pl.BlockSpec((1, Ho, Wo, coutp), lambda n: (n, 0, 0, 0)),
                pl.BlockSpec((1, 8, coutp), lambda n: (n, 0, 0)),
            ],
            scratch_shapes=[
                pltpu.VMEM((Hp, Wp, C), mm_dtype),          # padded activation
                pltpu.VMEM((Ho * Wo, coutp), jnp.float32),  # conv accumulator
            ],
        ),
        compiler_params=pltpu.CompilerParams(
            dimension_semantics=("parallel",),    # images independent (v7x: 2 TCs)
            vmem_limit_bytes=64 * 1024 * 1024,
        ),
    )(x,
      scale.reshape(1, 1, C).astype(jnp.float32),
      bias.reshape(1, 1, C).astype(jnp.float32),
      w.astype(mm_dtype),
      b.reshape(1, coutp).astype(jnp.float32))
    return y, stats


# ---------------------------------------------------------------------------
# Glue: fold BatchNorm (training-mode) statistics into per-channel scale/bias.
# ---------------------------------------------------------------------------
def _bn_scale_bias_from_tensor(x_nhwc, gamma, beta, eps=1e-5):
    # bn1 only: stats of the raw input (cannot be fused into its consumer pass).
    mean = jnp.mean(x_nhwc, axis=(0, 1, 2))
    var = jnp.var(x_nhwc, axis=(0, 1, 2))       # biased, matches PyTorch normalization
    scale = gamma * lax.rsqrt(var + eps)
    return scale, beta - mean * scale


def _fold_bn_from_stats(stats, count, gamma_p, beta_p, eps=1e-5):
    # stats: (G, 8, Cp) with row 0 = sum, row 1 = sum of squares.
    s = jnp.sum(stats[:, 0, :], axis=0)
    q = jnp.sum(stats[:, 1, :], axis=0)
    mean = s / count
    var = jnp.maximum(q / count - mean * mean, 0.0)   # biased
    scale = gamma_p * lax.rsqrt(var + eps)
    return scale, beta_p - mean * scale


def bottleneck_resmap_forward(x_nchw, p, stride, padding, mm_dtype=jnp.bfloat16):
    # NCHW <-> NHWC only at the module boundary; keep NHWC end-to-end when chaining.
    x = jnp.transpose(x_nchw, (0, 2, 3, 1)).astype(jnp.float32)
    N, H, W, ni = x.shape
    c4 = p["w1"].shape[1]
    no = p["w3"].shape[1]
    c4p = _round_up(c4, 128)     # lane-dense hidden channels
    nop = _round_up(no, 128)     # lane-dense output channels

    # Intermediate activations live in HBM in the MXU dtype (bf16 on the
    # production path) -> halves inter-stage HBM traffic; final output stays f32.
    act_dtype = mm_dtype

    # One-time lane-dense padding of weights / biases / BN affine params.
    w1p = _pad_last(p["w1"], c4p)
    b1p = _pad_last(p["c1_b"], c4p)
    g2p, be2p = _pad_last(p["bn2_g"], c4p), _pad_last(p["bn2_b"], c4p)
    w2p = jnp.pad(p["w2"], ((0, 0), (0, 0), (0, c4p - c4), (0, c4p - c4)))
    b2p = _pad_last(p["c2_b"], c4p)
    g3p, be3p = _pad_last(p["bn3_g"], c4p), _pad_last(p["bn3_b"], c4p)
    w3p = jnp.pad(p["w3"], ((0, c4p - c4), (0, nop - no)))
    b3p = _pad_last(p["c3_b"], nop)

    # stage 1: bn1 -> relu -> conv1 (1x1); emits bn2 stats as a side output.
    s1, sb1 = _bn_scale_bias_from_tensor(x, p["bn1_g"], p["bn1_b"])
    M1 = N * H * W
    y1, st1 = bn_relu_conv1x1(x.reshape(M1, ni), s1, sb1, w1p, b1p,
                              mm_dtype=mm_dtype, out_dtype=act_dtype)
    y1 = y1.reshape(N, H, W, c4p)

    # stage 2: bn2 -> relu -> conv2 (3x3, stride, padding); emits bn3 stats.
    s2, sb2 = _fold_bn_from_stats(st1, M1, g2p, be2p)
    y2, st2 = bn_relu_conv3x3(y1, s2, sb2, w2p, b2p, stride, padding,
                              mm_dtype=mm_dtype, out_dtype=act_dtype)
    _, Ho, Wo, _ = y2.shape

    # stage 3: bn3 -> relu -> conv3 (1x1); final output in f32.
    M3 = N * Ho * Wo
    s3, sb3 = _fold_bn_from_stats(st2, M3, g3p, be3p)
    y3, _ = bn_relu_conv1x1(y2.reshape(M3, c4p), s3, sb3, w3p, b3p,
                            mm_dtype=mm_dtype, out_dtype=jnp.float32)
    y3 = y3[:, :no].reshape(N, Ho, Wo, no)

    return jnp.transpose(y3, (0, 3, 1, 2))   # NHWC -> NCHW


# ---------------------------------------------------------------------------
# Pure-JAX f32 reference (same math) for correctness checks.
# ---------------------------------------------------------------------------
def reference_forward(x_nchw, p, stride, padding):
    x = jnp.transpose(x_nchw, (0, 2, 3, 1)).astype(jnp.float32)

    def bnrelu(t, g, b):
        s, bb = _bn_scale_bias_from_tensor(t, g, b)
        return jnp.maximum(t * s + bb, 0.0)

    a = bnrelu(x, p["bn1_g"], p["bn1_b"])
    y1 = jnp.einsum("nhwc,cd->nhwd", a, p["w1"]) + p["c1_b"]
    a = bnrelu(y1, p["bn2_g"], p["bn2_b"])
    a = jnp.pad(a, ((0, 0), (padding, padding), (padding, padding), (0, 0)))
    y2 = lax.conv_general_dilated(
        a, p["w2"], window_strides=(stride, stride), padding="VALID",
        dimension_numbers=("NHWC", "HWIO", "NHWC")) + p["c2_b"]
    a = bnrelu(y2, p["bn3_g"], p["bn3_b"])
    y3 = jnp.einsum("nhwc,cd->nhwd", a, p["w3"]) + p["c3_b"]
    return jnp.transpose(y3, (0, 3, 1, 2))


if __name__ == "__main__":
    ni, no, stride, padding = 4, 8, 1, 1
    N, H, W = 2, 16, 16
    c4 = no // 4

    key = jax.random.PRNGKey(0)
    ks = jax.random.split(key, 13)
    p = {
        "bn1_g": 1.0 + 0.1 * jax.random.normal(ks[0], (ni,), jnp.float32),
        "bn1_b": 0.1 * jax.random.normal(ks[1], (ni,), jnp.float32),
        "w1":    0.2 * jax.random.normal(ks[2], (ni, c4), jnp.float32),        # conv1 1x1 (Cin,Cout)
        "c1_b":  0.05 * jax.random.normal(ks[3], (c4,), jnp.float32),
        "bn2_g": 1.0 + 0.1 * jax.random.normal(ks[4], (c4,), jnp.float32),
        "bn2_b": 0.1 * jax.random.normal(ks[5], (c4,), jnp.float32),
        "w2":    0.2 * jax.random.normal(ks[6], (3, 3, c4, c4), jnp.float32),  # conv2 HWIO
        "c2_b":  0.05 * jax.random.normal(ks[7], (c4,), jnp.float32),
        "bn3_g": 1.0 + 0.1 * jax.random.normal(ks[8], (c4,), jnp.float32),
        "bn3_b": 0.1 * jax.random.normal(ks[9], (c4,), jnp.float32),
        "w3":    0.2 * jax.random.normal(ks[10], (c4, no), jnp.float32),       # conv3 1x1 (Cin,Cout)
        "c3_b":  0.05 * jax.random.normal(ks[11], (no,), jnp.float32),
    }
    x = jax.random.normal(ks[12], (N, ni, H, W), jnp.float32)  # NCHW like PyTorch

    ref = reference_forward(x, p, stride, padding)

    # f32-MXU path (f32 intermediates): tight tolerance (catches real bugs).
    out_f32 = jax.block_until_ready(
        bottleneck_resmap_forward(x, p, stride, padding, mm_dtype=jnp.float32))
    assert out_f32.shape == (N, no, H, W), out_f32.shape
    err_f32 = float(jnp.max(jnp.abs(out_f32 - ref)))
    assert err_f32 < 1e-3, f"f32 path max abs error vs reference: {err_f32}"

    # bf16-MXU production path (bf16 intermediates): relative-L2 check.
    out_bf16 = jax.block_until_ready(
        bottleneck_resmap_forward(x, p, stride, padding, mm_dtype=jnp.bfloat16))
    rel = float(jnp.linalg.norm(out_bf16 - ref) / jnp.linalg.norm(ref))
    assert rel < 5e-2, f"bf16 path relative L2 error vs reference: {rel}"

    print("KERNEL_OK")
</pallas_src>

<mosaic_0001>
module attributes {stable_mosaic.version = 11 : i64} {
  func.func @_bn_relu_conv1x1_kernel(%arg0: i32, %arg1: memref<512x4xf32, #tpu.memory_space<vmem>>, %arg2: memref<1x4xf32, #tpu.memory_space<vmem>>, %arg3: memref<1x4xf32, #tpu.memory_space<vmem>>, %arg4: memref<4x128xf32, #tpu.memory_space<vmem>>, %arg5: memref<1x128xf32, #tpu.memory_space<vmem>>, %arg6: memref<512x128xf32, #tpu.memory_space<vmem>>, %arg7: memref<1x8x128xf32, #tpu.memory_space<vmem>>) attributes {dimension_semantics = [#tpu.dimension_semantics<parallel>], iteration_bounds = array<i64: 1>, scalar_prefetch = 0 : i64, scratch_operands = 0 : i64, tpu.core_type = #tpu.core_type<tc>, window_params = [{transform_indices = @transform_0, window_bounds = array<i64: 512, 4>}, {pipeline_mode = #tpu.pipeline_mode<synchronous>, transform_indices = @transform_1, window_bounds = array<i64: 1, 4>}, {pipeline_mode = #tpu.pipeline_mode<synchronous>, transform_indices = @transform_2, window_bounds = array<i64: 1, 4>}, {pipeline_mode = #tpu.pipeline_mode<synchronous>, transform_indices = @transform_3, window_bounds = array<i64: 4, 128>}, {pipeline_mode = #tpu.pipeline_mode<synchronous>, transform_indices = @transform_4, window_bounds = array<i64: 1, 128>}, {transform_indices = @transform_5, window_bounds = array<i64: 512, 128>}, {transform_indices = @transform_6, window_bounds = array<i64: 1, 8, 128>}]} {
    %c0 = arith.constant 0 : index
    %c0_0 = arith.constant 0 : index
    %0 = vector.load %arg1[%c0, %c0_0] : memref<512x4xf32, #tpu.memory_space<vmem>>, vector<512x4xf32>
    %c0_1 = arith.constant 0 : index
    %c0_2 = arith.constant 0 : index
    %1 = vector.load %arg2[%c0_1, %c0_2] : memref<1x4xf32, #tpu.memory_space<vmem>>, vector<1x4xf32>
    %2 = vector.broadcast %1 : vector<1x4xf32> to vector<512x4xf32>
    %3 = arith.mulf %0, %2 : vector<512x4xf32>
    %c0_3 = arith.constant 0 : index
    %c0_4 = arith.constant 0 : index
    %4 = vector.load %arg3[%c0_3, %c0_4] : memref<1x4xf32, #tpu.memory_space<vmem>>, vector<1x4xf32>
    %5 = vector.broadcast %4 : vector<1x4xf32> to vector<512x4xf32>
    %6 = arith.addf %3, %5 : vector<512x4xf32>
    %cst = arith.constant 0.000000e+00 : f32
    %7 = vector.broadcast %cst : f32 to vector<512x4xf32>
    %8 = arith.maximumf %6, %7 : vector<512x4xf32>
    %c0_5 = arith.constant 0 : index
    %c0_6 = arith.constant 0 : index
    %9 = vector.load %arg4[%c0_5, %c0_6] : memref<4x128xf32, #tpu.memory_space<vmem>>, vector<4x128xf32>
    %cst_7 = arith.constant dense<0.000000e+00> : vector<512x128xf32>
    %10 = tpu.matmul %8, %9, %cst_7 {dimension_numbers = #tpu.dot_dimension_numbers<[1], [0], [0], [1], [0, 0, 1, 1], [], []>} : vector<512x4xf32>, vector<4x128xf32>, vector<512x128xf32> -> vector<512x128xf32>
    %c0_8 = arith.constant 0 : index
    %c0_9 = arith.constant 0 : index
    %11 = vector.load %arg5[%c0_8, %c0_9] : memref<1x128xf32, #tpu.memory_space<vmem>>, vector<1x128xf32>
    %12 = vector.broadcast %11 : vector<1x128xf32> to vector<512x128xf32>
    %13 = arith.addf %10, %12 : vector<512x128xf32>
    %c0_10 = arith.constant 0 : index
    %c0_11 = arith.constant 0 : index
    %14 = vector.load %arg6[%c0_10, %c0_11] : memref<512x128xf32, #tpu.memory_space<vmem>>, vector<512x128xf32>
    tpu.vector_store %arg6[%c0_10, %c0_11], %13 {strides = array<i32>} : memref<512x128xf32, #tpu.memory_space<vmem>>, vector<512x128xf32>,
    %cst_12 = arith.constant dense<0.000000e+00> : vector<128xf32>
    %15 = vector.multi_reduction <add>, %13, %cst_12 [0] : vector<512x128xf32> to vector<128xf32>
    %16 = vector.shape_cast %15 : vector<128xf32> to vector<1x128xf32>
    %17 = arith.mulf %13, %13 : vector<512x128xf32>
    %cst_13 = arith.constant dense<0.000000e+00> : vector<128xf32>
    %18 = vector.multi_reduction <add>, %17, %cst_13 [0] : vector<512x128xf32> to vector<128xf32>
    %19 = vector.shape_cast %18 : vector<128xf32> to vector<1x128xf32>
    %20 = tpu.iota {dimensions = array<i32: 0>} : vector<8x128xi32>
    %c0_i32 = arith.constant 0 : i32
    %21 = vector.broadcast %c0_i32 : i32 to vector<8x128xi32>
    %22 = arith.cmpi eq, %20, %21 : vector<8x128xi32>
    %23 = vector.shape_cast %16 : vector<1x128xf32> to vector<1x128xf32>
    %24 = vector.broadcast %23 : vector<1x128xf32> to vector<8x128xf32>
    %c1_i32 = arith.constant 1 : i32
    %25 = vector.broadcast %c1_i32 : i32 to vector<8x128xi32>
    %26 = arith.cmpi eq, %20, %25 : vector<8x128xi32>
    %27 = vector.shape_cast %19 : vector<1x128xf32> to vector<1x128xf32>
    %28 = vector.broadcast %27 : vector<1x128xf32> to vector<8x128xf32>
    %cst_14 = arith.constant 0.000000e+00 : f32
    %29 = vector.broadcast %cst_14 : f32 to vector<8x128xf32>
    %30 = arith.select %26, %28, %29 : vector<8x128xi1>, vector<8x128xf32>
    %31 = arith.select %22, %24, %30 : vector<8x128xi1>, vector<8x128xf32>
    %32 = vector.shape_cast %31 : vector<8x128xf32> to vector<1x8x128xf32>
    %c0_15 = arith.constant 0 : index
    %c0_16 = arith.constant 0 : index
    %c0_17 = arith.constant 0 : index
    %33 = vector.load %arg7[%c0_15, %c0_16, %c0_17] : memref<1x8x128xf32, #tpu.memory_space<vmem>>, vector<1x8x128xf32>
    tpu.vector_store %arg7[%c0_15, %c0_16, %c0_17], %32 {strides = array<i32>} : memref<1x8x128xf32, #tpu.memory_space<vmem>>, vector<1x8x128xf32>,
    return
  }
  func.func @transform_0(%arg0: i32) -> (i32, i32) {
    %c0_i32 = arith.constant 0 : i32
    %c0_i32_0 = arith.constant 0 : i32
    return %arg0, %c0_i32 : i32, i32
  }
  func.func @transform_1(%arg0: i32) -> (i32, i32) {
    %c0_i32 = arith.constant 0 : i32
    %c0_i32_0 = arith.constant 0 : i32
    %c0_i32_1 = arith.constant 0 : i32
    return %c0_i32, %c0_i32_0 : i32, i32
  }
  func.func @transform_2(%arg0: i32) -> (i32, i32) {
    %c0_i32 = arith.constant 0 : i32
    %c0_i32_0 = arith.constant 0 : i32
    %c0_i32_1 = arith.constant 0 : i32
    return %c0_i32, %c0_i32_0 : i32, i32
  }
  func.func @transform_3(%arg0: i32) -> (i32, i32) {
    %c0_i32 = arith.constant 0 : i32
    %c0_i32_0 = arith.constant 0 : i32
    %c0_i32_1 = arith.constant 0 : i32
    return %c0_i32, %c0_i32_0 : i32, i32
  }
  func.func @transform_4(%arg0: i32) -> (i32, i32) {
    %c0_i32 = arith.constant 0 : i32
    %c0_i32_0 = arith.constant 0 : i32
    %c0_i32_1 = arith.constant 0 : i32
    return %c0_i32, %c0_i32_0 : i32, i32
  }
  func.func @transform_5(%arg0: i32) -> (i32, i32) {
    %c0_i32 = arith.constant 0 : i32
    %c0_i32_0 = arith.constant 0 : i32
    return %arg0, %c0_i32 : i32, i32
  }
  func.func @transform_6(%arg0: i32) -> (i32, i32, i32) {
    %c0_i32 = arith.constant 0 : i32
    %c0_i32_0 = arith.constant 0 : i32
    %c0_i32_1 = arith.constant 0 : i32
    return %arg0, %c0_i32, %c0_i32_0 : i32, i32, i32
  }
}

</mosaic_0001>

<llo_original>
// kernel: tpu_custom_call.1
$region0: #{tpu_custom_call.1}
  #allocation0 [shape = 'u32[]', space=smem, size = 0x4, offset = 0x4, fixed_abs, tag = 'smem constant byte address 0x4 - core index']
  #allocation1 [shape = 'u32[144,128]{1,0:T(1,128)}', space=vmem, size = 0x12000, scoped, tag = 'internal scratch']
  %s0 = inlined_call_operand.hbm [shape: f32[512,4], index: 0, kind: input, shape index: {}]
  %s1 = inlined_call_operand.hbm [shape: f32[1,4], index: 1, kind: input, shape index: {}]
  %s2 = inlined_call_operand.hbm [shape: f32[1,4], index: 2, kind: input, shape index: {}]
  %s3 = inlined_call_operand.hbm [shape: f32[4,128], index: 3, kind: input, shape index: {}]
  %s4 = inlined_call_operand.hbm [shape: f32[1,128], index: 4, kind: input, shape index: {}]
  %s5 = inlined_call_operand.hbm [shape: f32[512,128], index: 5, kind: output, shape index: {0}]
  %s6 = inlined_call_operand.hbm [shape: f32[1,8,128], index: 6, kind: output, shape index: {1}]
  %7 = xla_tuple %s5, %s6
  %s8 = sld [smem:[#allocation0]]
  $region58: #{tpu_custom_call.1} parent=0
    _
  %s10 = ssub.s32 1, %s8
  %s11 = scalar_select 0, %s10, %s8
  $region1: #{tpu_custom_call.1} parent=0
    #allocation2 [shape = 'u8[262144]{0}', space=vmem, size = 0x40000, scoped, tag = 'input window, operand 0, single buffered']
    #allocation3 [shape = 's32[1]{0}', space=sflag, size = 0x4, scoped, tag = 'scoped memory for tpu_custom_call.1']
    #allocation4 [shape = 's32[1]{0}', space=sflag, size = 0x4, scoped, tag = 'scoped memory for tpu_custom_call.1']
    #allocation5 [shape = 'u8[512]{0}', space=vmem, size = 0x400, scoped, tag = 'input window, operand 1, single buffered']
    #allocation6 [shape = 's32[1]{0}', space=sflag, size = 0x4, scoped, tag = 'scoped memory for tpu_custom_call.1']
    #allocation7 [shape = 'u8[512]{0}', space=vmem, size = 0x400, scoped, tag = 'input window, operand 2, single buffered']
    #allocation8 [shape = 'u8[2048]{0}', space=vmem, size = 0x800, scoped, tag = 'input window, operand 3, single buffered']
    #allocation9 [shape = 's32[1]{0}', space=sflag, size = 0x4, scoped, tag = 'scoped memory for tpu_custom_call.1']
    #allocation10 [shape = 'u8[512]{0}', space=vmem, size = 0x400, scoped, tag = 'input window, operand 4, single buffered']
    #allocation11 [shape = 'u8[262144]{0}', space=vmem, size = 0x40000, scoped, tag = 'output window, operand 0, single buffered']
    #allocation12 [shape = 'u8[4096]{0}', space=vmem, size = 0x1000, scoped, tag = 'output window, operand 1, single buffered']
    #allocation13 [shape = 's32[1]{0}', space=sflag, size = 0x4, scoped, tag = 'scoped memory for tpu_custom_call.1']
    %12 = vsyncpa [#allocation3], 0
    %13 = vsyncpa [#allocation6], 0
    %14 = vsyncpa [#allocation9], 0
    %15 = vsyncpa [#allocation4], 0
    %16 = vsyncpa [#allocation13], 0
    // Predicated region
    $region2: #{tpu_custom_call.1} parent=1 // pred_check
      _
    $region3: #{tpu_custom_call.1} parent=1 // pred_check_branch
      %18 = sbr.rel (0) target = $region5
    $region4: #{tpu_custom_call.1} parent=1 // pred_region
      %s20 = ssub.s32 8192, 8192
      %21 = vsyncadd [#allocation3], %s20
      %s22 = sshll.u32 [#allocation2], 4
      %s23 = int_to_ptr.vmem [resolvable:$true] %s22
      %28 = dma.hbm_to_vmem [thread:$0]  %s0, 8192, %s23, [#allocation3], 128, 128, 8
    $region5: #{tpu_custom_call.1} parent=1 // pred_fallthru
      _
    // Predicated region
    $region6: #{tpu_custom_call.1} parent=1 // pred_check
      _
    $region7: #{tpu_custom_call.1} parent=1 // pred_check_branch
      %30 = sbr.rel (0) target = $region9
    $region8: #{tpu_custom_call.1} parent=1 // pred_region
      %s32 = ssub.s32 16, 16
      %33 = vsyncadd [#allocation6], %s32
      %s35 = sshll.u32 [#allocation5], 4
      %s36 = int_to_ptr.vmem [resolvable:$true] %s35
      %38 = dma.hbm_to_vmem [thread:$0]  %s1, 16, %s36, [#allocation6]
    $region9: #{tpu_custom_call.1} parent=1 // pred_fallthru
      _
    // Predicated region
    $region10: #{tpu_custom_call.1} parent=1 // pred_check
      _
    $region11: #{tpu_custom_call.1} parent=1 // pred_check_branch
      %40 = sbr.rel (0) target = $region13
    $region12: #{tpu_custom_call.1} parent=1 // pred_region
      %s42 = ssub.s32 16, 16
      %43 = vsyncadd [#allocation6], %s42
      %s45 = sshll.u32 [#allocation7], 4
      %s46 = int_to_ptr.vmem [resolvable:$true] %s45
      %48 = dma.hbm_to_vmem [thread:$0]  %s2, 16, %s46, [#allocation6]
    $region13: #{tpu_custom_call.1} parent=1 // pred_fallthru
      _
    // Predicated region
    $region14: #{tpu_custom_call.1} parent=1 // pred_check
      _
    $region15: #{tpu_custom_call.1} parent=1 // pred_check_branch
      %50 = sbr.rel (0) target = $region17
    $region16: #{tpu_custom_call.1} parent=1 // pred_region
      %s52 = ssub.s32 64, 64
      %53 = vsyncadd [#allocation9], %s52
      %s55 = sshll.u32 [#allocation8], 4
      %s56 = int_to_ptr.vmem [resolvable:$true] %s55
      %58 = dma.hbm_to_vmem [thread:$0]  %s3, 64, %s56, [#allocation9]
    $region17: #{tpu_custom_call.1} parent=1 // pred_fallthru
      _
    // Predicated region
    $region18: #{tpu_custom_call.1} parent=1 // pred_check
      _
    $region19: #{tpu_custom_call.1} parent=1 // pred_check_branch
      %60 = sbr.rel (0) target = $region21
    $region20: #{tpu_custom_call.1} parent=1 // pred_region
      %s62 = ssub.s32 16, 16
      %63 = vsyncadd [#allocation9], %s62
      %s65 = sshll.u32 [#allocation10], 4
      %s66 = int_to_ptr.vmem [resolvable:$true] %s65
      %68 = dma.hbm_to_vmem [thread:$0]  %s4, 16, %s66, [#allocation9]
    $region21: #{tpu_custom_call.1} parent=1 // pred_fallthru
      _
    // Predicated region
    $region22: #{tpu_custom_call.1} parent=1 // pred_check
      _
    $region23: #{tpu_custom_call.1} parent=1 // pred_check_branch
      %70 = sbr.rel (0) target = $region25
    $region24: #{tpu_custom_call.1} parent=1 // pred_region
      %71 = dma.done [#allocation3], 8192
    $region25: #{tpu_custom_call.1} parent=1 // pred_fallthru
      _
    // Predicated region
    $region26: #{tpu_custom_call.1} parent=1 // pred_check
      _
    $region27: #{tpu_custom_call.1} parent=1 // pred_check_branch
      %73 = sbr.rel (0) target = $region29
    $region28: #{tpu_custom_call.1} parent=1 // pred_region
      %74 = dma.done [#allocation6], 16
    $region29: #{tpu_custom_call.1} parent=1 // pred_fallthru
      _
    // Predicated region
    $region30: #{tpu_custom_call.1} parent=1 // pred_check
      _
    $region31: #{tpu_custom_call.1} parent=1 // pred_check_branch
      %76 = sbr.rel (0) target = $region33
    $region32: #{tpu_custom_call.1} parent=1 // pred_region
      %77 = dma.done [#allocation6], 16
    $region33: #{tpu_custom_call.1} parent=1 // pred_fallthru
      _
    // Predicated region
    $region34: #{tpu_custom_call.1} parent=1 // pred_check
      _
    $region35: #{tpu_custom_call.1} parent=1 // pred_check_branch
      %79 = sbr.rel (0) target = $region37
    $region36: #{tpu_custom_call.1} parent=1 // pred_region
      %80 = dma.done [#allocation9], 64
    $region37: #{tpu_custom_call.1} parent=1 // pred_fallthru
      _
    // Predicated region
    $region38: #{tpu_custom_call.1} parent=1 // pred_check
      _
    $region39: #{tpu_custom_call.1} parent=1 // pred_check_branch
      %82 = sbr.rel (0) target = $region41
    $region40: #{tpu_custom_call.1} parent=1 // pred_region
      %83 = dma.done [#allocation9], 16
    $region41: #{tpu_custom_call.1} parent=1 // pred_fallthru
      _
    %v84 = vld [vmem:[#allocation2] sm:$0xff]
    %v85 = vld [vmem:[#allocation2 + $0x8] sm:$0xff]
    %v86 = vld [vmem:[#allocation2 + $0x10] sm:$0xff]
    %v87 = vld [vmem:[#allocation2 + $0x18] sm:$0xff]
    %v88 = vld [vmem:[#allocation2 + $0x20] sm:$0xff]
    %v89 = vld [vmem:[#allocation2 + $0x28] sm:$0xff]
    %v90 = vld [vmem:[#allocation2 + $0x30] sm:$0xff]
    %v91 = vld [vmem:[#allocation2 + $0x38] sm:$0xff]
    %v92 = vld [vmem:[#allocation2 + $0x40] sm:$0xff]
    %v93 = vld [vmem:[#allocation2 + $0x48] sm:$0xff]
    %v94 = vld [vmem:[#allocation2 + $0x50] sm:$0xff]
    %v95 = vld [vmem:[#allocation2 + $0x58] sm:$0xff]
    %v96 = vld [vmem:[#allocation2 + $0x60] sm:$0xff]
    %v97 = vld [vmem:[#allocation2 + $0x68] sm:$0xff]
    %v98 = vld [vmem:[#allocation2 + $0x70] sm:$0xff]
    %v99 = vld [vmem:[#allocation2 + $0x78] sm:$0xff]
    %v100 = vld [vmem:[#allocation2 + $0x80] sm:$0xff]
    %v101 = vld [vmem:[#allocation2 + $0x88] sm:$0xff]
    %v102 = vld [vmem:[#allocation2 + $0x90] sm:$0xff]
    %v103 = vld [vmem:[#allocation2 + $0x98] sm:$0xff]
    %v104 = vld [vmem:[#allocation2 + $0xa0] sm:$0xff]
    %v105 = vld [vmem:[#allocation2 + $0xa8] sm:$0xff]
    %v106 = vld [vmem:[#allocation2 + $0xb0] sm:$0xff]
    %v107 = vld [vmem:[#allocation2 + $0xb8] sm:$0xff]
    %v108 = vld [vmem:[#allocation2 + $0xc0] sm:$0xff]
    %v109 = vld [vmem:[#allocation2 + $0xc8] sm:$0xff]
    %v110 = vld [vmem:[#allocation2 + $0xd0] sm:$0xff]
    %v111 = vld [vmem:[#allocation2 + $0xd8] sm:$0xff]
    %v112 = vld [vmem:[#allocation2 + $0xe0] sm:$0xff]
    %v113 = vld [vmem:[#allocation2 + $0xe8] sm:$0xff]
    %v114 = vld [vmem:[#allocation2 + $0xf0] sm:$0xff]
    %v115 = vld [vmem:[#allocation2 + $0xf8] sm:$0xff]
    %v116 = vld [vmem:[#allocation2 + $0x100] sm:$0xff]
    %v117 = vld [vmem:[#allocation2 + $0x108] sm:$0xff]
    %v118 = vld [vmem:[#allocation2 + $0x110] sm:$0xff]
    %v119 = vld [vmem:[#allocation2 + $0x118] sm:$0xff]
    %v120 = vld [vmem:[#allocation2 + $0x120] sm:$0xff]
    %v121 = vld [vmem:[#allocation2 + $0x128] sm:$0xff]
    %v122 = vld [vmem:[#allocation2 + $0x130] sm:$0xff]
    %v123 = vld [vmem:[#allocation2 + $0x138] sm:$0xff]
    %v124 = vld [vmem:[#allocation2 + $0x140] sm:$0xff]
    %v125 = vld [vmem:[#allocation2 + $0x148] sm:$0xff]
    %v126 = vld [vmem:[#allocation2 + $0x150] sm:$0xff]
    %v127 = vld [vmem:[#allocation2 + $0x158] sm:$0xff]
    %v128 = vld [vmem:[#allocation2 + $0x160] sm:$0xff]
    %v129 = vld [vmem:[#allocation2 + $0x168] sm:$0xff]
    %v130 = vld [vmem:[#allocation2 + $0x170] sm:$0xff]
    %v131 = vld [vmem:[#allocation2 + $0x178] sm:$0xff]
    %v132 = vld [vmem:[#allocation2 + $0x180] sm:$0xff]
    %v133 = vld [vmem:[#allocation2 + $0x188] sm:$0xff]
    %v134 = vld [vmem:[#allocation2 + $0x190] sm:$0xff]
    %v135 = vld [vmem:[#allocation2 + $0x198] sm:$0xff]
    %v136 = vld [vmem:[#allocation2 + $0x1a0] sm:$0xff]
    %v137 = vld [vmem:[#allocation2 + $0x1a8] sm:$0xff]
    %v138 = vld [vmem:[#allocation2 + $0x1b0] sm:$0xff]
    %v139 = vld [vmem:[#allocation2 + $0x1b8] sm:$0xff]
    %v140 = vld [vmem:[#allocation2 + $0x1c0] sm:$0xff]
    %v141 = vld [vmem:[#allocation2 + $0x1c8] sm:$0xff]
    %v142 = vld [vmem:[#allocation2 + $0x1d0] sm:$0xff]
    %v143 = vld [vmem:[#allocation2 + $0x1d8] sm:$0xff]
    %v144 = vld [vmem:[#allocation2 + $0x1e0] sm:$0xff]
    %v145 = vld [vmem:[#allocation2 + $0x1e8] sm:$0xff]
    %v146 = vld [vmem:[#allocation2 + $0x1f0] sm:$0xff]
    %v147 = vld [vmem:[#allocation2 + $0x1f8] sm:$0xff]
    %v148 = vld [vmem:[#allocation5] sm:$0x1]
    %v150 = vlaneseq
    %v151 = vshrl.u32 %v150, 7
    %v152 = vsub.s32 0, %v151
    %v153 = vrot.slane %v148, %v152
    %v155 = vmul.f32 %v84, %v153
    %v156 = vmul.f32 %v85, %v153
    %v157 = vmul.f32 %v86, %v153
    %v158 = vmul.f32 %v87, %v153
    %v159 = vmul.f32 %v88, %v153
    %v160 = vmul.f32 %v89, %v153
    %v161 = vmul.f32 %v90, %v153
    %v162 = vmul.f32 %v91, %v153
    %v163 = vmul.f32 %v92, %v153
    %v164 = vmul.f32 %v93, %v153
    %v165 = vmul.f32 %v94, %v153
    %v166 = vmul.f32 %v95, %v153
    %v167 = vmul.f32 %v96, %v153
    %v168 = vmul.f32 %v97, %v153
    %v169 = vmul.f32 %v98, %v153
    %v170 = vmul.f32 %v99, %v153
    %v171 = vmul.f32 %v100, %v153
    %v172 = vmul.f32 %v101, %v153
    %v173 = vmul.f32 %v102, %v153
    %v174 = vmul.f32 %v103, %v153
    %v175 = vmul.f32 %v104, %v153
    %v176 = vmul.f32 %v105, %v153
    %v177 = vmul.f32 %v106, %v153
    %v178 = vmul.f32 %v107, %v153
    %v179 = vmul.f32 %v108, %v153
    %v180 = vmul.f32 %v109, %v153
    %v181 = vmul.f32 %v110, %v153
    %v182 = vmul.f32 %v111, %v153
    %v183 = vmul.f32 %v112, %v153
    %v184 = vmul.f32 %v113, %v153
    %v185 = vmul.f32 %v114, %v153
    %v186 = vmul.f32 %v115, %v153
    %v187 = vmul.f32 %v116, %v153
    %v188 = vmul.f32 %v117, %v153
    %v189 = vmul.f32 %v118, %v153
    %v190 = vmul.f32 %v119, %v153
    %v191 = vmul.f32 %v120, %v153
    %v192 = vmul.f32 %v121, %v153
    %v193 = vmul.f32 %v122, %v153
    %v194 = vmul.f32 %v123, %v153
    %v195 = vmul.f32 %v124, %v153
    %v196 = vmul.f32 %v125, %v153
    %v197 = vmul.f32 %v126, %v153
    %v198 = vmul.f32 %v127, %v153
    %v199 = vmul.f32 %v128, %v153
    %v200 = vmul.f32 %v129, %v153
    %v201 = vmul.f32 %v130, %v153
    %v202 = vmul.f32 %v131, %v153
    %v203 = vmul.f32 %v132, %v153
    %v204 = vmul.f32 %v133, %v153
    %v205 = vmul.f32 %v134, %v153
    %v206 = vmul.f32 %v135, %v153
    %v207 = vmul.f32 %v136, %v153
    %v208 = vmul.f32 %v137, %v153
    %v209 = vmul.f32 %v138, %v153
    %v210 = vmul.f32 %v139, %v153
    %v211 = vmul.f32 %v140, %v153
    %v212 = vmul.f32 %v141, %v153
    %v213 = vmul.f32 %v142, %v153
    %v214 = vmul.f32 %v143, %v153
    %v215 = vmul.f32 %v144, %v153
    %v216 = vmul.f32 %v145, %v153
    %v217 = vmul.f32 %v146, %v153
    %v218 = vmul.f32 %v147, %v153
    %v219 = vld [vmem:[#allocation7] sm:$0x1]
    %v221 = vlaneseq
    %v222 = vshrl.u32 %v221, 7
    %v223 = vsub.s32 0, %v222
    %v224 = vrot.slane %v219, %v223
    %v226 = vadd.f32 %v155, %v224
    %v227 = vadd.f32 %v156, %v224
    %v228 = vadd.f32 %v157, %v224
    %v229 = vadd.f32 %v158, %v224
    %v230 = vadd.f32 %v159, %v224
    %v231 = vadd.f32 %v160, %v224
    %v232 = vadd.f32 %v161, %v224
    %v233 = vadd.f32 %v162, %v224
    %v234 = vadd.f32 %v163, %v224
    %v235 = vadd.f32 %v164, %v224
    %v236 = vadd.f32 %v165, %v224
    %v237 = vadd.f32 %v166, %v224
    %v238 = vadd.f32 %v167, %v224
    %v239 = vadd.f32 %v168, %v224
    %v240 = vadd.f32 %v169, %v224
    %v241 = vadd.f32 %v170, %v224
    %v242 = vadd.f32 %v171, %v224
    %v243 = vadd.f32 %v172, %v224
    %v244 = vadd.f32 %v173, %v224
    %v245 = vadd.f32 %v174, %v224
    %v246 = vadd.f32 %v175, %v224
    %v247 = vadd.f32 %v176, %v224
    %v248 = vadd.f32 %v177, %v224
    %v249 = vadd.f32 %v178, %v224
    %v250 = vadd.f32 %v179, %v224
    %v251 = vadd.f32 %v180, %v224
    %v252 = vadd.f32 %v181, %v224
    %v253 = vadd.f32 %v182, %v224
    %v254 = vadd.f32 %v183, %v224
    %v255 = vadd.f32 %v184, %v224
    %v256 = vadd.f32 %v185, %v224
    %v257 = vadd.f32 %v186, %v224
    %v258 = vadd.f32 %v187, %v224
    %v259 = vadd.f32 %v188, %v224
    %v260 = vadd.f32 %v189, %v224
    %v261 = vadd.f32 %v190, %v224
    %v262 = vadd.f32 %v191, %v224
    %v263 = vadd.f32 %v192, %v224
    %v264 = vadd.f32 %v193, %v224
    %v265 = vadd.f32 %v194, %v224
    %v266 = vadd.f32 %v195, %v224
    %v267 = vadd.f32 %v196, %v224
    %v268 = vadd.f32 %v197, %v224
    %v269 = vadd.f32 %v198, %v224
    %v270 = vadd.f32 %v199, %v224
    %v271 = vadd.f32 %v200, %v224
    %v272 = vadd.f32 %v201, %v224
    %v273 = vadd.f32 %v202, %v224
    %v274 = vadd.f32 %v203, %v224
    %v275 = vadd.f32 %v204, %v224
    %v276 = vadd.f32 %v205, %v224
    %v277 = vadd.f32 %v206, %v224
    %v278 = vadd.f32 %v207, %v224
    %v279 = vadd.f32 %v208, %v224
    %v280 = vadd.f32 %v209, %v224
    %v281 = vadd.f32 %v210, %v224
    %v282 = vadd.f32 %v211, %v224
    %v283 = vadd.f32 %v212, %v224
    %v284 = vadd.f32 %v213, %v224
    %v285 = vadd.f32 %v214, %v224
    %v286 = vadd.f32 %v215, %v224
    %v287 = vadd.f32 %v216, %v224
    %v288 = vadd.f32 %v217, %v224
    %v289 = vadd.f32 %v218, %v224
    %v290 = vmax.f32 %v226, 0.0
    %v291 = vmax.f32 %v227, 0.0
    %v292 = vmax.f32 %v228, 0.0
    %v293 = vmax.f32 %v229, 0.0
    %v294 = vmax.f32 %v230, 0.0
    %v295 = vmax.f32 %v231, 0.0
    %v296 = vmax.f32 %v232, 0.0
    %v297 = vmax.f32 %v233, 0.0
    %v298 = vmax.f32 %v234, 0.0
    %v299 = vmax.f32 %v235, 0.0
    %v300 = vmax.f32 %v236, 0.0
    %v301 = vmax.f32 %v237, 0.0
    %v302 = vmax.f32 %v238, 0.0
    %v303 = vmax.f32 %v239, 0.0
    %v304 = vmax.f32 %v240, 0.0
    %v305 = vmax.f32 %v241, 0.0
    %v306 = vmax.f32 %v242, 0.0
    %v307 = vmax.f32 %v243, 0.0
    %v308 = vmax.f32 %v244, 0.0
    %v309 = vmax.f32 %v245, 0.0
    %v310 = vmax.f32 %v246, 0.0
    %v311 = vmax.f32 %v247, 0.0
    %v312 = vmax.f32 %v248, 0.0
    %v313 = vmax.f32 %v249, 0.0
    %v314 = vmax.f32 %v250, 0.0
    %v315 = vmax.f32 %v251, 0.0
    %v316 = vmax.f32 %v252, 0.0
    %v317 = vmax.f32 %v253, 0.0
    %v318 = vmax.f32 %v254, 0.0
    %v319 = vmax.f32 %v255, 0.0
    %v320 = vmax.f32 %v256, 0.0
    %v321 = vmax.f32 %v257, 0.0
    %v322 = vmax.f32 %v258, 0.0
    %v323 = vmax.f32 %v259, 0.0
    %v324 = vmax.f32 %v260, 0.0
    %v325 = vmax.f32 %v261, 0.0
    %v326 = vmax.f32 %v262, 0.0
    %v327 = vmax.f32 %v263, 0.0
    %v328 = vmax.f32 %v264, 0.0
    %v329 = vmax.f32 %v265, 0.0
    %v330 = vmax.f32 %v266, 0.0
    %v331 = vmax.f32 %v267, 0.0
    %v332 = vmax.f32 %v268, 0.0
    %v333 = vmax.f32 %v269, 0.0
    %v334 = vmax.f32 %v270, 0.0
    %v335 = vmax.f32 %v271, 0.0
    %v336 = vmax.f32 %v272, 0.0
    %v337 = vmax.f32 %v273, 0.0
    %v338 = vmax.f32 %v274, 0.0
    %v339 = vmax.f32 %v275, 0.0
    %v340 = vmax.f32 %v276, 0.0
    %v341 = vmax.f32 %v277, 0.0
    %v342 = vmax.f32 %v278, 0.0
    %v343 = vmax.f32 %v279, 0.0
    %v344 = vmax.f32 %v280, 0.0
    %v345 = vmax.f32 %v281, 0.0
    %v346 = vmax.f32 %v282, 0.0
    %v347 = vmax.f32 %v283, 0.0
    %v348 = vmax.f32 %v284, 0.0
    %v349 = vmax.f32 %v285, 0.0
    %v350 = vmax.f32 %v286, 0.0
    %v351 = vmax.f32 %v287, 0.0
    %v352 = vmax.f32 %v288, 0.0
    %v353 = vmax.f32 %v289, 0.0
    %v354 = vld [vmem:[#allocation8] sm:$0xf]
    %v355 = vld [vmem:[#allocation10] sm:$0x1]
    %v357 = vlaneseq
    %v358 = vshrl.u32 %v357, 7
    %v359 = vsub.s32 0, %v358
    %v360 = vrot.slane %v355, %v359
    %vm362 = vcmask 31744
    %v364 = vsel %vm362, %v290, 0
    %v367 = vsel %vm362, %v291, 0
    %v370 = vsel %vm362, %v292, 0
    %v373 = vsel %vm362, %v293, 0
    %v376 = vsel %vm362, %v294, 0
    %v379 = vsel %vm362, %v295, 0
    %v382 = vsel %vm362, %v296, 0
    %v385 = vsel %vm362, %v297, 0
    %v388 = vsel %vm362, %v298, 0
    %v391 = vsel %vm362, %v299, 0
    %v394 = vsel %vm362, %v300, 0
    %v397 = vsel %vm362, %v301, 0
    %v400 = vsel %vm362, %v302, 0
    %v403 = vsel %vm362, %v303, 0
    %v406 = vsel %vm362, %v304, 0
    %v409 = vsel %vm362, %v305, 0
    %v412 = vsel %vm362, %v306, 0
    %v415 = vsel %vm362, %v307, 0
    %v418 = vsel %vm362, %v308, 0
    %v421 = vsel %vm362, %v309, 0
    %v424 = vsel %vm362, %v310, 0
    %v427 = vsel %vm362, %v311, 0
    %v430 = vsel %vm362, %v312, 0
    %v433 = vsel %vm362, %v313, 0
    %v436 = vsel %vm362, %v314, 0
    %v439 = vsel %vm362, %v315, 0
    %v442 = vsel %vm362, %v316, 0
    %v445 = vsel %vm362, %v317, 0
    %v448 = vsel %vm362, %v318, 0
    %v451 = vsel %vm362, %v319, 0
    %v454 = vsel %vm362, %v320, 0
    %v457 = vsel %vm362, %v321, 0
    %v460 = vsel %vm362, %v322, 0
    %v463 = vsel %vm362, %v323, 0
    %v466 = vsel %vm362, %v324, 0
    %v469 = vsel %vm362, %v325, 0
    %v472 = vsel %vm362, %v326, 0
    %v475 = vsel %vm362, %v327, 0
    %v478 = vsel %vm362, %v328, 0
    %v481 = vsel %vm362, %v329, 0
    %v484 = vsel %vm362, %v330, 0
    %v487 = vsel %vm362, %v331, 0
    %v490 = vsel %vm362, %v332, 0
    %v493 = vsel %vm362, %v333, 0
    %v496 = vsel %vm362, %v334, 0
    %v499 = vsel %vm362, %v335, 0
    %v502 = vsel %vm362, %v336, 0
    %v505 = vsel %vm362, %v337, 0
    %v508 = vsel %vm362, %v338, 0
    %v511 = vsel %vm362, %v339, 0
    %v514 = vsel %vm362, %v340, 0
    %v517 = vsel %vm362, %v341, 0
    %v520 = vsel %vm362, %v342, 0
    %v523 = vsel %vm362, %v343, 0
    %v526 = vsel %vm362, %v344, 0
    %v529 = vsel %vm362, %v345, 0
    %v532 = vsel %vm362, %v346, 0
    %v535 = vsel %vm362, %v347, 0
    %v538 = vsel %vm362, %v348, 0
    %v541 = vsel %vm362, %v349, 0
    %v544 = vsel %vm362, %v350, 0
    %v547 = vsel %vm362, %v351, 0
    %v550 = vsel %vm362, %v352, 0
    %v553 = vsel %vm362, %v353, 0
    %vm555 = vcmask 1043456
    %v557 = vsel %vm555, %v354, 0
    %559 = vmatprep.subr.mxu0 0.0
    %560 = vmatpush1.msra.mxu0 %v557
    %561 = vmatprep.subr.mxu0 0.0
    %562 = vmatpush1.msra.mxu0 0.0
    %563 = vmatprep.subr.mxu0 0.0
    %564 = vmatpush1.msra.mxu0 0.0
    %565 = vmatprep.subr.mxu0 0.0
    %566 = vmatpush1.msra.mxu0 0.0
    %567 = vmatprep.subr.mxu0 0.0
    %568 = vmatpush1.msra.mxu0 0.0
    %569 = vmatprep.subr.mxu0 0.0
    %570 = vmatpush1.msra.mxu0 0.0
    %571 = vmatprep.subr.mxu0 0.0
    %572 = vmatpush1.msra.mxu0 0.0
    %573 = vmatprep.subr.mxu0 0.0
    %574 = vmatpush1.msra.mxu0 0.0
    %575 = vmatprep.subr.mxu0 0.0
    %576 = vmatpush1.msra.mxu0 0.0
    %577 = vmatprep.subr.mxu0 0.0
    %578 = vmatpush1.msra.mxu0 0.0
    %579 = vmatprep.subr.mxu0 0.0
    %580 = vmatpush1.msra.mxu0 0.0
    %581 = vmatprep.subr.mxu0 0.0
    %582 = vmatpush1.msra.mxu0 0.0
    %583 = vmatprep.subr.mxu0 0.0
    %584 = vmatpush1.msra.mxu0 0.0
    %585 = vmatprep.subr.mxu0 0.0
    %586 = vmatpush1.msra.mxu0 0.0
    %587 = vmatprep.subr.mxu0 0.0
    %588 = vmatpush1.msra.mxu0 0.0
    %589 = vmatprep.subr.mxu0 0.0
    %590 = vmatpush1.msra.mxu0 0.0
    %591 = vmatprep.subr.mxu0 0.0
    %592 = vmatpush1.msra.mxu0 0.0
    %593 = vmatprep.subr.mxu0 0.0
    %594 = vmatpush1.msra.mxu0 0.0
    %595 = vmatprep.subr.mxu0 0.0
    %596 = vmatpush1.msra.mxu0 0.0
    %597 = vmatprep.subr.mxu0 0.0
    %598 = vmatpush1.msra.mxu0 0.0
    %599 = vmatprep.subr.mxu0 0.0
    %600 = vmatpush1.msra.mxu0 0.0
    %601 = vmatprep.subr.mxu0 0.0
    %602 = vmatpush1.msra.mxu0 0.0
    %603 = vmatprep.subr.mxu0 0.0
    %604 = vmatpush1.msra.mxu0 0.0
    %605 = vmatprep.subr.mxu0 0.0
    %606 = vmatpush1.msra.mxu0 0.0
    %607 = vmatprep.subr.mxu0 0.0
    %608 = vmatpush1.msra.mxu0 0.0
    %609 = vmatprep.subr.mxu0 0.0
    %610 = vmatpush1.msra.mxu0 0.0
    %611 = vmatprep.subr.mxu0 0.0
    %612 = vmatpush1.msra.mxu0 0.0
    %613 = vmatprep.subr.mxu0 0.0
    %614 = vmatpush1.msra.mxu0 0.0
    %615 = vmatprep.subr.mxu0 0.0
    %616 = vmatpush1.msra.mxu0 0.0
    %617 = vmatprep.subr.mxu0 0.0
    %618 = vmatpush1.msra.mxu0 0.0
    %619 = vmatprep.subr.mxu0 0.0
    %620 = vmatpush1.msra.mxu0 0.0
    %621 = vmatprep.subr.mxu0 0.0
    %622 = vmatpush1.msra.mxu0 0.0
    %623 = vmatprep.mubr.f32.mxu0 0.0
    %624 = vmatmul.mubr.f32.gmra.mrb[0].mxu0 %v364
    %v625 = vpop.f32.mrb[0].mxu0
    %v626 = vadd.f32 %v360, %v625
    %v627 = vpop.f32.mrb[0].mxu0
    %628 = vmatprep.mubr.f32.mxu0 0.0
    %629 = vmatmul.mubr.f32.gmra.mrb[0].mxu0 %v367
    %v630 = vpop.f32.mrb[0].mxu0
    %v631 = vadd.f32 %v360, %v630
    %v632 = vpop.f32.mrb[0].mxu0
    %633 = vmatprep.mubr.f32.mxu0 0.0
    %634 = vmatmul.mubr.f32.gmra.mrb[0].mxu0 %v370
    %v635 = vpop.f32.mrb[0].mxu0
    %v636 = vadd.f32 %v360, %v635
    %v637 = vpop.f32.mrb[0].mxu0
    %638 = vmatprep.mubr.f32.mxu0 0.0
    %639 = vmatmul.mubr.f32.gmra.mrb[0].mxu0 %v373
    %v640 = vpop.f32.mrb[0].mxu0
    %v641 = vadd.f32 %v360, %v640
    %v642 = vpop.f32.mrb[0].mxu0
    %643 = vmatprep.mubr.f32.mxu0 0.0
    %644 = vmatmul.mubr.f32.gmra.mrb[0].mxu0 %v376
    %v645 = vpop.f32.mrb[0].mxu0
    %v646 = vadd.f32 %v360, %v645
    %v647 = vpop.f32.mrb[0].mxu0
    %648 = vmatprep.mubr.f32.mxu0 0.0
    %649 = vmatmul.mubr.f32.gmra.mrb[0].mxu0 %v379
    %v650 = vpop.f32.mrb[0].mxu0
    %v651 = vadd.f32 %v360, %v650
    %v652 = vpop.f32.mrb[0].mxu0
    %653 = vmatprep.mubr.f32.mxu0 0.0
    %654 = vmatmul.mubr.f32.gmra.mrb[0].mxu0 %v382
    %v655 = vpop.f32.mrb[0].mxu0
    %v656 = vadd.f32 %v360, %v655
    %v657 = vpop.f32.mrb[0].mxu0
    %658 = vmatprep.mubr.f32.mxu0 0.0
    %659 = vmatmul.mubr.f32.gmra.mrb[0].mxu0 %v385
    %v660 = vpop.f32.mrb[0].mxu0
    %v661 = vadd.f32 %v360, %v660
    %v662 = vpop.f32.mrb[0].mxu0
    %663 = vmatprep.mubr.f32.mxu0 0.0
    %664 = vmatmul.mubr.f32.gmra.mrb[0].mxu0 %v388
    %v665 = vpop.f32.mrb[0].mxu0
    %v666 = vadd.f32 %v360, %v665
    %v667 = vpop.f32.mrb[0].mxu0
    %668 = vmatprep.mubr.f32.mxu0 0.0
    %669 = vmatmul.mubr.f32.gmra.mrb[0].mxu0 %v391
    %v670 = vpop.f32.mrb[0].mxu0
    %v671 = vadd.f32 %v360, %v670
    %v672 = vpop.f32.mrb[0].mxu0
    %673 = vmatprep.mubr.f32.mxu0 0.0
    %674 = vmatmul.mubr.f32.gmra.mrb[0].mxu0 %v394
    %v675 = vpop.f32.mrb[0].mxu0
    %v676 = vadd.f32 %v360, %v675
    %v677 = vpop.f32.mrb[0].mxu0
    %678 = vmatprep.mubr.f32.mxu0 0.0
    %679 = vmatmul.mubr.f32.gmra.mrb[0].mxu0 %v397
    %v680 = vpop.f32.mrb[0].mxu0
    %v681 = vadd.f32 %v360, %v680
    %v682 = vpop.f32.mrb[0].mxu0
    %683 = vmatprep.mubr.f32.mxu0 0.0
    %684 = vmatmul.mubr.f32.gmra.mrb[0].mxu0 %v400
    %v685 = vpop.f32.mrb[0].mxu0
    %v686 = vadd.f32 %v360, %v685
    %v687 = vpop.f32.mrb[0].mxu0
    %688 = vmatprep.mubr.f32.mxu0 0.0
    %689 = vmatmul.mubr.f32.gmra.mrb[0].mxu0 %v403
    %v690 = vpop.f32.mrb[0].mxu0
    %v691 = vadd.f32 %v360, %v690
    %v692 = vpop.f32.mrb[0].mxu0
    %693 = vmatprep.mubr.f32.mxu0 0.0
    %694 = vmatmul.mubr.f32.gmra.mrb[0].mxu0 %v406
    %v695 = vpop.f32.mrb[0].mxu0
    %v696 = vadd.f32 %v360, %v695
    %v697 = vpop.f32.mrb[0].mxu0
    %698 = vmatprep.mubr.f32.mxu0 0.0
    %699 = vmatmul.mubr.f32.gmra.mrb[0].mxu0 %v409
    %v700 = vpop.f32.mrb[0].mxu0
    %v701 = vadd.f32 %v360, %v700
    %v702 = vpop.f32.mrb[0].mxu0
    %703 = vmatprep.mubr.f32.mxu0 0.0
    %704 = vmatmul.mubr.f32.gmra.mrb[0].mxu0 %v412
    %v705 = vpop.f32.mrb[0].mxu0
    %v706 = vadd.f32 %v360, %v705
    %v707 = vpop.f32.mrb[0].mxu0
    %708 = vmatprep.mubr.f32.mxu0 0.0
    %709 = vmatmul.mubr.f32.gmra.mrb[0].mxu0 %v415
    %v710 = vpop.f32.mrb[0].mxu0
    %v711 = vadd.f32 %v360, %v710
    %v712 = vpop.f32.mrb[0].mxu0
    %713 = vmatprep.mubr.f32.mxu0 0.0
    %714 = vmatmul.mubr.f32.gmra.mrb[0].mxu0 %v418
    %v715 = vpop.f32.mrb[0].mxu0
    %v716 = vadd.f32 %v360, %v715
    %v717 = vpop.f32.mrb[0].mxu0
    %718 = vmatprep.mubr.f32.mxu0 0.0
    %719 = vmatmul.mubr.f32.gmra.mrb[0].mxu0 %v421
    %v720 = vpop.f32.mrb[0].mxu0
    %v721 = vadd.f32 %v360, %v720
    %v722 = vpop.f32.mrb[0].mxu0
    %723 = vmatprep.mubr.f32.mxu0 0.0
    %724 = vmatmul.mubr.f32.gmra.mrb[0].mxu0 %v424
    %v725 = vpop.f32.mrb[0].mxu0
    %v726 = vadd.f32 %v360, %v725
    %v727 = vpop.f32.mrb[0].mxu0
    %728 = vmatprep.mubr.f32.mxu0 0.0
    %729 = vmatmul.mubr.f32.gmra.mrb[0].mxu0 %v427
    %v730 = vpop.f32.mrb[0].mxu0
    %v731 = vadd.f32 %v360, %v730
    %v732 = vpop.f32.mrb[0].mxu0
    %733 = vmatprep.mubr.f32.mxu0 0.0
    %734 = vmatmul.mubr.f32.gmra.mrb[0].mxu0 %v430
    %v735 = vpop.f32.mrb[0].mxu0
    %v736 = vadd.f32 %v360, %v735
    %v737 = vpop.f32.mrb[0].mxu0
    %738 = vmatprep.mubr.f32.mxu0 0.0
    %739 = vmatmul.mubr.f32.gmra.mrb[0].mxu0 %v433
    %v740 = vpop.f32.mrb[0].mxu0
    %v741 = vadd.f32 %v360, %v740
    %v742 = vpop.f32.mrb[0].mxu0
    %743 = vmatprep.mubr.f32.mxu0 0.0
    %744 = vmatmul.mubr.f32.gmra.mrb[0].mxu0 %v436
    %v745 = vpop.f32.mrb[0].mxu0
    %v746 = vadd.f32 %v360, %v745
    %v747 = vpop.f32.mrb[0].mxu0
    %748 = vmatprep.mubr.f32.mxu0 0.0
    %749 = vmatmul.mubr.f32.gmra.mrb[0].mxu0 %v439
    %v750 = vpop.f32.mrb[0].mxu0
    %v751 = vadd.f32 %v360, %v750
    %v752 = vpop.f32.mrb[0].mxu0
    %753 = vmatprep.mubr.f32.mxu0 0.0
    %754 = vmatmul.mubr.f32.gmra.mrb[0].mxu0 %v442
    %v755 = vpop.f32.mrb[0].mxu0
    %v756 = vadd.f32 %v360, %v755
    %v757 = vpop.f32.mrb[0].mxu0
    %758 = vmatprep.mubr.f32.mxu0 0.0
    %759 = vmatmul.mubr.f32.gmra.mrb[0].mxu0 %v445
    %v760 = vpop.f32.mrb[0].mxu0
    %v761 = vadd.f32 %v360, %v760
    %v762 = vpop.f32.mrb[0].mxu0
    %763 = vmatprep.mubr.f32.mxu0 0.0
    %764 = vmatmul.mubr.f32.gmra.mrb[0].mxu0 %v448
    %v765 = vpop.f32.mrb[0].mxu0
    %v766 = vadd.f32 %v360, %v765
    %v767 = vpop.f32.mrb[0].mxu0
    %768 = vmatprep.mubr.f32.mxu0 0.0
    %769 = vmatmul.mubr.f32.gmra.mrb[0].mxu0 %v451
    %v770 = vpop.f32.mrb[0].mxu0
    %v771 = vadd.f32 %v360, %v770
    %v772 = vpop.f32.mrb[0].mxu0
    %773 = vmatprep.mubr.f32.mxu0 0.0
    %774 = vmatmul.mubr.f32.gmra.mrb[0].mxu0 %v454
    %v775 = vpop.f32.mrb[0].mxu0
    %v776 = vadd.f32 %v360, %v775
    %v777 = vpop.f32.mrb[0].mxu0
    %778 = vmatprep.mubr.f32.mxu0 0.0
    %779 = vmatmul.mubr.f32.gmra.mrb[0].mxu0 %v457
    %v780 = vpop.f32.mrb[0].mxu0
    %v781 = vadd.f32 %v360, %v780
    %v782 = vpop.f32.mrb[0].mxu0
    %783 = vmatprep.mubr.f32.mxu0 0.0
    %784 = vmatmul.mubr.f32.gmra.mrb[0].mxu0 %v460
    %v785 = vpop.f32.mrb[0].mxu0
    %v786 = vadd.f32 %v360, %v785
    %v787 = vpop.f32.mrb[0].mxu0
    %788 = vmatprep.mubr.f32.mxu0 0.0
    %789 = vmatmul.mubr.f32.gmra.mrb[0].mxu0 %v463
    %v790 = vpop.f32.mrb[0].mxu0
    %v791 = vadd.f32 %v360, %v790
    %v792 = vpop.f32.mrb[0].mxu0
    %793 = vmatprep.mubr.f32.mxu0 0.0
    %794 = vmatmul.mubr.f32.gmra.mrb[0].mxu0 %v466
    %v795 = vpop.f32.mrb[0].mxu0
    %v796 = vadd.f32 %v360, %v795
    %v797 = vpop.f32.mrb[0].mxu0
    %798 = vmatprep.mubr.f32.mxu0 0.0
    %799 = vmatmul.mubr.f32.gmra.mrb[0].mxu0 %v469
    %v800 = vpop.f32.mrb[0].mxu0
    %v801 = vadd.f32 %v360, %v800
    %v802 = vpop.f32.mrb[0].mxu0
    %803 = vmatprep.mubr.f32.mxu0 0.0
    %804 = vmatmul.mubr.f32.gmra.mrb[0].mxu0 %v472
    %v805 = vpop.f32.mrb[0].mxu0
    %v806 = vadd.f32 %v360, %v805
    %v807 = vpop.f32.mrb[0].mxu0
    %808 = vmatprep.mubr.f32.mxu0 0.0
    %809 = vmatmul.mubr.f32.gmra.mrb[0].mxu0 %v475
    %v810 = vpop.f32.mrb[0].mxu0
    %v811 = vadd.f32 %v360, %v810
    %v812 = vpop.f32.mrb[0].mxu0
    %813 = vmatprep.mubr.f32.mxu0 0.0
    %814 = vmatmul.mubr.f32.gmra.mrb[0].mxu0 %v478
    %v815 = vpop.f32.mrb[0].mxu0
    %v816 = vadd.f32 %v360, %v815
    %v817 = vpop.f32.mrb[0].mxu0
    %818 = vmatprep.mubr.f32.mxu0 0.0
    %819 = vmatmul.mubr.f32.gmra.mrb[0].mxu0 %v481
    %v820 = vpop.f32.mrb[0].mxu0
    %v821 = vadd.f32 %v360, %v820
    %v822 = vpop.f32.mrb[0].mxu0
    %823 = vmatprep.mubr.f32.mxu0 0.0
    %824 = vmatmul.mubr.f32.gmra.mrb[0].mxu0 %v484
    %v825 = vpop.f32.mrb[0].mxu0
    %v826 = vadd.f32 %v360, %v825
    %v827 = vpop.f32.mrb[0].mxu0
    %828 = vmatprep.mubr.f32.mxu0 0.0
    %829 = vmatmul.mubr.f32.gmra.mrb[0].mxu0 %v487
    %v830 = vpop.f32.mrb[0].mxu0
    %v831 = vadd.f32 %v360, %v830
    %v832 = vpop.f32.mrb[0].mxu0
    %833 = vmatprep.mubr.f32.mxu0 0.0
    %834 = vmatmul.mubr.f32.gmra.mrb[0].mxu0 %v490
    %v835 = vpop.f32.mrb[0].mxu0
    %v836 = vadd.f32 %v360, %v835
    %v837 = vpop.f32.mrb[0].mxu0
    %838 = vmatprep.mubr.f32.mxu0 0.0
    %839 = vmatmul.mubr.f32.gmra.mrb[0].mxu0 %v493
    %v840 = vpop.f32.mrb[0].mxu0
    %v841 = vadd.f32 %v360, %v840
    %v842 = vpop.f32.mrb[0].mxu0
    %843 = vmatprep.mubr.f32.mxu0 0.0
    %844 = vmatmul.mubr.f32.gmra.mrb[0].mxu0 %v496
    %v845 = vpop.f32.mrb[0].mxu0
    %v846 = vadd.f32 %v360, %v845
    %v847 = vpop.f32.mrb[0].mxu0
    %848 = vmatprep.mubr.f32.mxu0 0.0
    %849 = vmatmul.mubr.f32.gmra.mrb[0].mxu0 %v499
    %v850 = vpop.f32.mrb[0].mxu0
    %v851 = vadd.f32 %v360, %v850
    %v852 = vpop.f32.mrb[0].mxu0
    %853 = vmatprep.mubr.f32.mxu0 0.0
    %854 = vmatmul.mubr.f32.gmra.mrb[0].mxu0 %v502
    %v855 = vpop.f32.mrb[0].mxu0
    %v856 = vadd.f32 %v360, %v855
    %v857 = vpop.f32.mrb[0].mxu0
    %858 = vmatprep.mubr.f32.mxu0 0.0
    %859 = vmatmul.mubr.f32.gmra.mrb[0].mxu0 %v505
    %v860 = vpop.f32.mrb[0].mxu0
    %v861 = vadd.f32 %v360, %v860
    %v862 = vpop.f32.mrb[0].mxu0
    %863 = vmatprep.mubr.f32.mxu0 0.0
    %864 = vmatmul.mubr.f32.gmra.mrb[0].mxu0 %v508
    %v865 = vpop.f32.mrb[0].mxu0
    %v866 = vadd.f32 %v360, %v865
    %v867 = vpop.f32.mrb[0].mxu0
    %868 = vmatprep.mubr.f32.mxu0 0.0
    %869 = vmatmul.mubr.f32.gmra.mrb[0].mxu0 %v511
    %v870 = vpop.f32.mrb[0].mxu0
    %v871 = vadd.f32 %v360, %v870
    %v872 = vpop.f32.mrb[0].mxu0
    %873 = vmatprep.mubr.f32.mxu0 0.0
    %874 = vmatmul.mubr.f32.gmra.mrb[0].mxu0 %v514
    %v875 = vpop.f32.mrb[0].mxu0
    %v876 = vadd.f32 %v360, %v875
    %v877 = vpop.f32.mrb[0].mxu0
    %878 = vmatprep.mubr.f32.mxu0 0.0
    %879 = vmatmul.mubr.f32.gmra.mrb[0].mxu0 %v517
    %v880 = vpop.f32.mrb[0].mxu0
    %v881 = vadd.f32 %v360, %v880
    %v882 = vpop.f32.mrb[0].mxu0
    %883 = vmatprep.mubr.f32.mxu0 0.0
    %884 = vmatmul.mubr.f32.gmra.mrb[0].mxu0 %v520
    %v885 = vpop.f32.mrb[0].mxu0
    %v886 = vadd.f32 %v360, %v885
    %v887 = vpop.f32.mrb[0].mxu0
    %888 = vmatprep.mubr.f32.mxu0 0.0
    %889 = vmatmul.mubr.f32.gmra.mrb[0].mxu0 %v523
    %v890 = vpop.f32.mrb[0].mxu0
    %v891 = vadd.f32 %v360, %v890
    %v892 = vpop.f32.mrb[0].mxu0
    %893 = vmatprep.mubr.f32.mxu0 0.0
    %894 = vmatmul.mubr.f32.gmra.mrb[0].mxu0 %v526
    %v895 = vpop.f32.mrb[0].mxu0
    %v896 = vadd.f32 %v360, %v895
    %v897 = vpop.f32.mrb[0].mxu0
    %898 = vmatprep.mubr.f32.mxu0 0.0
    %899 = vmatmul.mubr.f32.gmra.mrb[0].mxu0 %v529
    %v900 = vpop.f32.mrb[0].mxu0
    %v901 = vadd.f32 %v360, %v900
    %v902 = vpop.f32.mrb[0].mxu0
    %903 = vmatprep.mubr.f32.mxu0 0.0
    %904 = vmatmul.mubr.f32.gmra.mrb[0].mxu0 %v532
    %v905 = vpop.f32.mrb[0].mxu0
    %v906 = vadd.f32 %v360, %v905
    %v907 = vpop.f32.mrb[0].mxu0
    %908 = vmatprep.mubr.f32.mxu0 0.0
    %909 = vmatmul.mubr.f32.gmra.mrb[0].mxu0 %v535
    %v910 = vpop.f32.mrb[0].mxu0
    %v911 = vadd.f32 %v360, %v910
    %v912 = vpop.f32.mrb[0].mxu0
    %913 = vmatprep.mubr.f32.mxu0 0.0
    %914 = vmatmul.mubr.f32.gmra.mrb[0].mxu0 %v538
    %v915 = vpop.f32.mrb[0].mxu0
    %v916 = vadd.f32 %v360, %v915
    %v917 = vpop.f32.mrb[0].mxu0
    %918 = vmatprep.mubr.f32.mxu0 0.0
    %919 = vmatmul.mubr.f32.gmra.mrb[0].mxu0 %v541
    %v920 = vpop.f32.mrb[0].mxu0
    %v921 = vadd.f32 %v360, %v920
    %v922 = vpop.f32.mrb[0].mxu0
    %923 = vmatprep.mubr.f32.mxu0 0.0
    %924 = vmatmul.mubr.f32.gmra.mrb[0].mxu0 %v544
    %v925 = vpop.f32.mrb[0].mxu0
    %v926 = vadd.f32 %v360, %v925
    %v927 = vpop.f32.mrb[0].mxu0
    %928 = vmatprep.mubr.f32.mxu0 0.0
    %929 = vmatmul.mubr.f32.gmra.mrb[0].mxu0 %v547
    %v930 = vpop.f32.mrb[0].mxu0
    %v931 = vadd.f32 %v360, %v930
    %v932 = vpop.f32.mrb[0].mxu0
    %933 = vmatprep.mubr.f32.mxu0 0.0
    %934 = vmatmul.mubr.f32.gmra.mrb[0].mxu0 %v550
    %v935 = vpop.f32.mrb[0].mxu0
    %v936 = vadd.f32 %v360, %v935
    %v937 = vpop.f32.mrb[0].mxu0
    %938 = vmatprep.mubr.f32.mxu0 0.0
    %939 = vmatmul.mubr.f32.gmra.mrb[0].mxu0 %v553
    %v940 = vpop.f32.mrb[0].mxu0
    %v941 = vadd.f32 %v360, %v940
    %v942 = vpop.f32.mrb[0].mxu0
    %943 = vdwg.mxu0
    %944 = vst [vmem:[#allocation11] sm:$0xff] %v626
    %945 = vst [vmem:[#allocation11 + $0x8] sm:$0xff] %v631
    %946 = vst [vmem:[#allocation11 + $0x10] sm:$0xff] %v636
    %947 = vst [vmem:[#allocation11 + $0x18] sm:$0xff] %v641
    %948 = vst [vmem:[#allocation11 + $0x20] sm:$0xff] %v646
    %949 = vst [vmem:[#allocation11 + $0x28] sm:$0xff] %v651
    %950 = vst [vmem:[#allocation11 + $0x30] sm:$0xff] %v656
    %951 = vst [vmem:[#allocation11 + $0x38] sm:$0xff] %v661
    %952 = vst [vmem:[#allocation11 + $0x40] sm:$0xff] %v666
    %953 = vst [vmem:[#allocation11 + $0x48] sm:$0xff] %v671
    %954 = vst [vmem:[#allocation11 + $0x50] sm:$0xff] %v676
    %955 = vst [vmem:[#allocation11 + $0x58] sm:$0xff] %v681
    %956 = vst [vmem:[#allocation11 + $0x60] sm:$0xff] %v686
    %957 = vst [vmem:[#allocation11 + $0x68] sm:$0xff] %v691
    %958 = vst [vmem:[#allocation11 + $0x70] sm:$0xff] %v696
    %959 = vst [vmem:[#allocation11 + $0x78] sm:$0xff] %v701
    %960 = vst [vmem:[#allocation11 + $0x80] sm:$0xff] %v706
    %961 = vst [vmem:[#allocation11 + $0x88] sm:$0xff] %v711
    %962 = vst [vmem:[#allocation11 + $0x90] sm:$0xff] %v716
    %963 = vst [vmem:[#allocation11 + $0x98] sm:$0xff] %v721
    %964 = vst [vmem:[#allocation11 + $0xa0] sm:$0xff] %v726
    %965 = vst [vmem:[#allocation11 + $0xa8] sm:$0xff] %v731
    %966 = vst [vmem:[#allocation11 + $0xb0] sm:$0xff] %v736
    %967 = vst [vmem:[#allocation11 + $0xb8] sm:$0xff] %v741
    %968 = vst [vmem:[#allocation11 + $0xc0] sm:$0xff] %v746
    %969 = vst [vmem:[#allocation11 + $0xc8] sm:$0xff] %v751
    %970 = vst [vmem:[#allocation11 + $0xd0] sm:$0xff] %v756
    %971 = vst [vmem:[#allocation11 + $0xd8] sm:$0xff] %v761
    %972 = vst [vmem:[#allocation11 + $0xe0] sm:$0xff] %v766
    %973 = vst [vmem:[#allocation11 + $0xe8] sm:$0xff] %v771
    %974 = vst [vmem:[#allocation11 + $0xf0] sm:$0xff] %v776
    %975 = vst [vmem:[#allocation11 + $0xf8] sm:$0xff] %v781
    %976 = vst [vmem:[#allocation11 + $0x100] sm:$0xff] %v786
    %977 = vst [vmem:[#allocation11 + $0x108] sm:$0xff] %v791
    %978 = vst [vmem:[#allocation11 + $0x110] sm:$0xff] %v796
    %979 = vst [vmem:[#allocation11 + $0x118] sm:$0xff] %v801
    %980 = vst [vmem:[#allocation11 + $0x120] sm:$0xff] %v806
    %981 = vst [vmem:[#allocation11 + $0x128] sm:$0xff] %v811
    %982 = vst [vmem:[#allocation11 + $0x130] sm:$0xff] %v816
    %983 = vst [vmem:[#allocation11 + $0x138] sm:$0xff] %v821
    %984 = vst [vmem:[#allocation11 + $0x140] sm:$0xff] %v826
    %985 = vst [vmem:[#allocation11 + $0x148] sm:$0xff] %v831
    %986 = vst [vmem:[#allocation11 + $0x150] sm:$0xff] %v836
    %987 = vst [vmem:[#allocation11 + $0x158] sm:$0xff] %v841
    %988 = vst [vmem:[#allocation11 + $0x160] sm:$0xff] %v846
    %989 = vst [vmem:[#allocation11 + $0x168] sm:$0xff] %v851
    %990 = vst [vmem:[#allocation11 + $0x170] sm:$0xff] %v856
    %991 = vst [vmem:[#allocation11 + $0x178] sm:$0xff] %v861
    %992 = vst [vmem:[#allocation11 + $0x180] sm:$0xff] %v866
    %993 = vst [vmem:[#allocation11 + $0x188] sm:$0xff] %v871
    %994 = vst [vmem:[#allocation11 + $0x190] sm:$0xff] %v876
    %995 = vst [vmem:[#allocation11 + $0x198] sm:$0xff] %v881
    %996 = vst [vmem:[#allocation11 + $0x1a0] sm:$0xff] %v886
    %997 = vst [vmem:[#allocation11 + $0x1a8] sm:$0xff] %v891
    %998 = vst [vmem:[#allocation11 + $0x1b0] sm:$0xff] %v896
    %999 = vst [vmem:[#allocation11 + $0x1b8] sm:$0xff] %v901
    %1000 = vst [vmem:[#allocation11 + $0x1c0] sm:$0xff] %v906
    %1001 = vst [vmem:[#allocation11 + $0x1c8] sm:$0xff] %v911
    %1002 = vst [vmem:[#allocation11 + $0x1d0] sm:$0xff] %v916
    %1003 = vst [vmem:[#allocation11 + $0x1d8] sm:$0xff] %v921
    %1004 = vst [vmem:[#allocation11 + $0x1e0] sm:$0xff] %v926
    %1005 = vst [vmem:[#allocation11 + $0x1e8] sm:$0xff] %v931
    %1006 = vst [vmem:[#allocation11 + $0x1f0] sm:$0xff] %v936
    %1007 = vst [vmem:[#allocation11 + $0x1f8] sm:$0xff] %v941
    %v1008 = vadd.f32 %v626, %v631
    %v1009 = vadd.f32 %v1008, %v636
    %v1010 = vadd.f32 %v1009, %v641
    %v1011 = vadd.f32 %v1010, %v646
    %v1012 = vadd.f32 %v1011, %v651
    %v1013 = vadd.f32 %v1012, %v656
    %v1014 = vadd.f32 %v1013, %v661
    %v1015 = vadd.f32 %v1014, %v666
    %v1016 = vadd.f32 %v1015, %v671
    %v1017 = vadd.f32 %v1016, %v676
    %v1018 = vadd.f32 %v1017, %v681
    %v1019 = vadd.f32 %v1018, %v686
    %v1020 = vadd.f32 %v1019, %v691
    %v1021 = vadd.f32 %v1020, %v696
    %v1022 = vadd.f32 %v1021, %v701
    %v1023 = vadd.f32 %v1022, %v706
    %v1024 = vadd.f32 %v1023, %v711
    %v1025 = vadd.f32 %v1024, %v716
    %v1026 = vadd.f32 %v1025, %v721
    %v1027 = vadd.f32 %v1026, %v726
    %v1028 = vadd.f32 %v1027, %v731
    %v1029 = vadd.f32 %v1028, %v736
    %v1030 = vadd.f32 %v1029, %v741
    %v1031 = vadd.f32 %v1030, %v746
    %v1032 = vadd.f32 %v1031, %v751
    %v1033 = vadd.f32 %v1032, %v756
    %v1034 = vadd.f32 %v1033, %v761
    %v1035 = vadd.f32 %v1034, %v766
    %v1036 = vadd.f32 %v1035, %v771
    %v1037 = vadd.f32 %v1036, %v776
    %v1038 = vadd.f32 %v1037, %v781
    %v1039 = vadd.f32 %v1038, %v786
    %v1040 = vadd.f32 %v1039, %v791
    %v1041 = vadd.f32 %v1040, %v796
    %v1042 = vadd.f32 %v1041, %v801
    %v1043 = vadd.f32 %v1042, %v806
    %v1044 = vadd.f32 %v1043, %v811
    %v1045 = vadd.f32 %v1044, %v816
    %v1046 = vadd.f32 %v1045, %v821
    %v1047 = vadd.f32 %v1046, %v826
    %v1048 = vadd.f32 %v1047, %v831
    %v1049 = vadd.f32 %v1048, %v836
    %v1050 = vadd.f32 %v1049, %v841
    %v1051 = vadd.f32 %v1050, %v846
    %v1052 = vadd.f32 %v1051, %v851
    %v1053 = vadd.f32 %v1052, %v856
    %v1054 = vadd.f32 %v1053, %v861
    %v1055 = vadd.f32 %v1054, %v866
    %v1056 = vadd.f32 %v1055, %v871
    %v1057 = vadd.f32 %v1056, %v876
    %v1058 = vadd.f32 %v1057, %v881
    %v1059 = vadd.f32 %v1058, %v886
    %v1060 = vadd.f32 %v1059, %v891
    %v1061 = vadd.f32 %v1060, %v896
    %v1062 = vadd.f32 %v1061, %v901
    %v1063 = vadd.f32 %v1062, %v906
    %v1064 = vadd.f32 %v1063, %v911
    %v1065 = vadd.f32 %v1064, %v916
    %v1066 = vadd.f32 %v1065, %v921
    %v1067 = vadd.f32 %v1066, %v926
    %v1068 = vadd.f32 %v1067, %v931
    %v1069 = vadd.f32 %v1068, %v936
    %v1070 = vadd.f32 %v1069, %v941
    %v1071 = vrot.slane %v1070, 4
    %v1072 = vadd.f32 %v1070, %v1071
    %v1073 = vrot.slane %v1072, 2
    %v1074 = vadd.f32 %v1072, %v1073
    %v1075 = vrot.slane %v1074, 1
    %v1076 = vadd.f32 %v1074, %v1075
    %v1077 = vmul.f32 %v626, %v626
    %v1078 = vmul.f32 %v631, %v631
    %v1079 = vmul.f32 %v636, %v636
    %v1080 = vmul.f32 %v641, %v641
    %v1081 = vmul.f32 %v646, %v646
    %v1082 = vmul.f32 %v651, %v651
    %v1083 = vmul.f32 %v656, %v656
    %v1084 = vmul.f32 %v661, %v661
    %v1085 = vmul.f32 %v666, %v666
    %v1086 = vmul.f32 %v671, %v671
    %v1087 = vmul.f32 %v676, %v676
    %v1088 = vmul.f32 %v681, %v681
    %v1089 = vmul.f32 %v686, %v686
    %v1090 = vmul.f32 %v691, %v691
    %v1091 = vmul.f32 %v696, %v696
    %v1092 = vmul.f32 %v701, %v701
    %v1093 = vmul.f32 %v706, %v706
    %v1094 = vmul.f32 %v711, %v711
    %v1095 = vmul.f32 %v716, %v716
    %v1096 = vmul.f32 %v721, %v721
    %v1097 = vmul.f32 %v726, %v726
    %v1098 = vmul.f32 %v731, %v731
    %v1099 = vmul.f32 %v736, %v736
    %v1100 = vmul.f32 %v741, %v741
    %v1101 = vmul.f32 %v746, %v746
    %v1102 = vmul.f32 %v751, %v751
    %v1103 = vmul.f32 %v756, %v756
    %v1104 = vmul.f32 %v761, %v761
    %v1105 = vmul.f32 %v766, %v766
    %v1106 = vmul.f32 %v771, %v771
    %v1107 = vmul.f32 %v776, %v776
    %v1108 = vmul.f32 %v781, %v781
    %v1109 = vmul.f32 %v786, %v786
    %v1110 = vmul.f32 %v791, %v791
    %v1111 = vmul.f32 %v796, %v796
    %v1112 = vmul.f32 %v801, %v801
    %v1113 = vmul.f32 %v806, %v806
    %v1114 = vmul.f32 %v811, %v811
    %v1115 = vmul.f32 %v816, %v816
    %v1116 = vmul.f32 %v821, %v821
    %v1117 = vmul.f32 %v826, %v826
    %v1118 = vmul.f32 %v831, %v831
    %v1119 = vmul.f32 %v836, %v836
    %v1120 = vmul.f32 %v841, %v841
    %v1121 = vmul.f32 %v846, %v846
    %v1122 = vmul.f32 %v851, %v851
    %v1123 = vmul.f32 %v856, %v856
    %v1124 = vmul.f32 %v861, %v861
    %v1125 = vmul.f32 %v866, %v866
    %v1126 = vmul.f32 %v871, %v871
    %v1127 = vmul.f32 %v876, %v876
    %v1128 = vmul.f32 %v881, %v881
    %v1129 = vmul.f32 %v886, %v886
    %v1130 = vmul.f32 %v891, %v891
    %v1131 = vmul.f32 %v896, %v896
    %v1132 = vmul.f32 %v901, %v901
    %v1133 = vmul.f32 %v906, %v906
    %v1134 = vmul.f32 %v911, %v911
    %v1135 = vmul.f32 %v916, %v916
    %v1136 = vmul.f32 %v921, %v921
    %v1137 = vmul.f32 %v926, %v926
    %v1138 = vmul.f32 %v931, %v931
    %v1139 = vmul.f32 %v936, %v936
    %v1140 = vmul.f32 %v941, %v941
    %v1141 = vadd.f32 %v1077, %v1078
    %v1142 = vadd.f32 %v1141, %v1079
    %v1143 = vadd.f32 %v1142, %v1080
    %v1144 = vadd.f32 %v1143, %v1081
    %v1145 = vadd.f32 %v1144, %v1082
    %v1146 = vadd.f32 %v1145, %v1083
    %v1147 = vadd.f32 %v1146, %v1084
    %v1148 = vadd.f32 %v1147, %v1085
    %v1149 = vadd.f32 %v1148, %v1086
    %v1150 = vadd.f32 %v1149, %v1087
    %v1151 = vadd.f32 %v1150, %v1088
    %v1152 = vadd.f32 %v1151, %v1089
    %v1153 = vadd.f32 %v1152, %v1090
    %v1154 = vadd.f32 %v1153, %v1091
    %v1155 = vadd.f32 %v1154, %v1092
    %v1156 = vadd.f32 %v1155, %v1093
    %v1157 = vadd.f32 %v1156, %v1094
    %v1158 = vadd.f32 %v1157, %v1095
    %v1159 = vadd.f32 %v1158, %v1096
    %v1160 = vadd.f32 %v1159, %v1097
    %v1161 = vadd.f32 %v1160, %v1098
    %v1162 = vadd.f32 %v1161, %v1099
    %v1163 = vadd.f32 %v1162, %v1100
    %v1164 = vadd.f32 %v1163, %v1101
    %v1165 = vadd.f32 %v1164, %v1102
    %v1166 = vadd.f32 %v1165, %v1103
    %v1167 = vadd.f32 %v1166, %v1104
    %v1168 = vadd.f32 %v1167, %v1105
    %v1169 = vadd.f32 %v1168, %v1106
    %v1170 = vadd.f32 %v1169, %v1107
    %v1171 = vadd.f32 %v1170, %v1108
    %v1172 = vadd.f32 %v1171, %v1109
    %v1173 = vadd.f32 %v1172, %v1110
    %v1174 = vadd.f32 %v1173, %v1111
    %v1175 = vadd.f32 %v1174, %v1112
    %v1176 = vadd.f32 %v1175, %v1113
    %v1177 = vadd.f32 %v1176, %v1114
    %v1178 = vadd.f32 %v1177, %v1115
    %v1179 = vadd.f32 %v1178, %v1116
    %v1180 = vadd.f32 %v1179, %v1117
    %v1181 = vadd.f32 %v1180, %v1118
    %v1182 = vadd.f32 %v1181, %v1119
    %v1183 = vadd.f32 %v1182, %v1120
    %v1184 = vadd.f32 %v1183, %v1121
    %v1185 = vadd.f32 %v1184, %v1122
    %v1186 = vadd.f32 %v1185, %v1123
    %v1187 = vadd.f32 %v1186, %v1124
    %v1188 = vadd.f32 %v1187, %v1125
    %v1189 = vadd.f32 %v1188, %v1126
    %v1190 = vadd.f32 %v1189, %v1127
    %v1191 = vadd.f32 %v1190, %v1128
    %v1192 = vadd.f32 %v1191, %v1129
    %v1193 = vadd.f32 %v1192, %v1130
    %v1194 = vadd.f32 %v1193, %v1131
    %v1195 = vadd.f32 %v1194, %v1132
    %v1196 = vadd.f32 %v1195, %v1133
    %v1197 = vadd.f32 %v1196, %v1134
    %v1198 = vadd.f32 %v1197, %v1135
    %v1199 = vadd.f32 %v1198, %v1136
    %v1200 = vadd.f32 %v1199, %v1137
    %v1201 = vadd.f32 %v1200, %v1138
    %v1202 = vadd.f32 %v1201, %v1139
    %v1203 = vadd.f32 %v1202, %v1140
    %v1204 = vrot.slane %v1203, 4
    %v1205 = vadd.f32 %v1203, %v1204
    %v1206 = vrot.slane %v1205, 2
    %v1207 = vadd.f32 %v1205, %v1206
    %v1208 = vrot.slane %v1207, 1
    %v1209 = vadd.f32 %v1207, %v1208
    %v1210 = vlaneseq
    %v1211 = vshrl.u32 %v1210, 7
    %vm1212 = vcmp.eq.s32.totalorder %v1211, 0
    %vm1213 = vcmp.eq.s32.totalorder %v1211, 1
    %v1214 = vsel %vm1213, %v1209, 0.0
    %v1215 = vsel %vm1212, %v1076, %v1214
    %1216 = vst [vmem:[#allocation12] sm:$0xff] %v1215
    // Predicated region
    $region42: #{tpu_custom_call.1} parent=1 // pred_check
      _
    $region43: #{tpu_custom_call.1} parent=1 // pred_check_branch
      %1218 = sbr.rel (0) target = $region45
    $region44: #{tpu_custom_call.1} parent=1 // pred_region
      %s1220 = ssub.s32 8192, 8192
      %1221 = vsyncadd [#allocation4], %s1220
      %s1222 = sshll.u32 [#allocation11], 4
      %s1223 = int_to_ptr.vmem [resolvable:$true] %s1222
      %1228 = dma.vmem_to_hbm [thread:$0]  %s1223, 8192, %s5, [#allocation4], 128, 128, 8
    $region45: #{tpu_custom_call.1} parent=1 // pred_fallthru
      _
    // Predicated region
    $region46: #{tpu_custom_call.1} parent=1 // pred_check
      _
    $region47: #{tpu_custom_call.1} parent=1 // pred_check_branch
      %1230 = sbr.rel (0) target = $region49
    $region48: #{tpu_custom_call.1} parent=1 // pred_region
      %s1232 = ssub.s32 128, 128
      %1233 = vsyncadd [#allocation13], %s1232
      %s1235 = sshll.u32 [#allocation12], 4
      %s1236 = int_to_ptr.vmem [resolvable:$true] %s1235
      %1238 = dma.vmem_to_hbm [thread:$0]  %s1236, 128, %s6, [#allocation13]
    $region49: #{tpu_custom_call.1} parent=1 // pred_fallthru
      _
    // Predicated region
    $region50: #{tpu_custom_call.1} parent=1 // pred_check
      _
    $region51: #{tpu_custom_call.1} parent=1 // pred_check_branch
      %1240 = sbr.rel (0) target = $region53
    $region52: #{tpu_custom_call.1} parent=1 // pred_region
      %1241 = dma.done [#allocation4], 8192
    $region53: #{tpu_custom_call.1} parent=1 // pred_fallthru
      _
    // Predicated region
    $region54: #{tpu_custom_call.1} parent=1 // pred_check
      _
    $region55: #{tpu_custom_call.1} parent=1 // pred_check_branch
      %1243 = sbr.rel (0) target = $region57
    $region56: #{tpu_custom_call.1} parent=1 // pred_region
      %1244 = dma.done [#allocation13], 128
    $region57: #{tpu_custom_call.1} parent=1 // pred_fallthru
      _
    %1245 = vsyncpa [#allocation3], 1
    %1246 = vsyncpa [#allocation6], 1
    %1247 = vsyncpa [#allocation9], 1
    %1248 = vsyncpa [#allocation4], 1
    %1249 = vsyncpa [#allocation13], 1

</llo_original>
